<compile_context>
chip_gen: v5e
topology: v5e:2x2
jax: 0.10.0
libtpu: 0.0.40
codegen_flags: <defaults>
</compile_context>

<pallas_src>
import functools

import jax
import jax.numpy as jnp
from jax import lax
from jax.experimental import pallas as pl
from jax.experimental.pallas import tpu as pltpu


# --------------------------------- kernel ---------------------------------------


def make_fused_kernel(K, dilation, padding, pad_aligned, c_out, has_down):
    """Fused: [causal dilated conv + bias + GLU gate] x2 + residual, one time tile."""
    c2 = 2 * c_out
    d, pad, pa = dilation, padding, pad_aligned

    def kernel(x_ref, w1_ref, b1_ref, w2_ref, b2_ref, o_ref, xh_ref, hh_ref):
        t = pl.program_id(1)
        Bt, TT, _ = x_ref.shape
        R = pa + TT
        off0 = pa - pad

        # First time tile of each batch block: the halo is the causal left zero pad.
        # (For t>0 the halo was written by the previous tile — requires the time axis
        #  to be the innermost, sequential ("arbitrary") grid axis.)
        @pl.when(t == 0)
        def _zero_halo():
            xh_ref[...] = jnp.zeros_like(xh_ref)
            hh_ref[...] = jnp.zeros_like(hh_ref)

        def taps(halo, tile):
            """K causal dilated taps, lane-concatenated -> (TT, K*C).

            halo: (pa, C) last rows of the previous tile (zeros at t==0);
            tile: (TT, C) current rows.  Tap j needs rows [off0+j*d, off0+j*d+TT) of
            concat(halo, tile): done with an XLU roll + aligned prefix slice, so no
            full-tile scratch round trip and no unaligned sublane concatenations.
            """
            padded = jnp.concatenate([halo, tile], axis=0)          # (pa+TT, C), aligned
            pieces = []
            for j in range(K - 1):
                o = off0 + j * d
                src = padded if o == 0 else pltpu.roll(padded, shift=R - o, axis=0)
                pieces.append(src[:TT, :])
            pieces.append(tile)          # last tap (offset == pad) is the current sample
            return jnp.concatenate(pieces, axis=-1)

        # ----- layer 1: K dilated taps (+ folded 1x1 downsample) as ONE MXU matmul -----
        xs = [x_ref[b] for b in range(Bt)]                           # (TT, cin) each
        slabs1 = []
        for b in range(Bt):
            slabs1.append(taps(xh_ref[b], xs[b]))
            xh_ref[b] = xs[b][TT - pa:, :]                           # carry causal halo
        slab1 = jnp.concatenate(slabs1, axis=0)                      # (Bt*TT, K*cin)
        # TODO(synk): for cin >= ~512 switch to K accumulating matmuls (no lane concat).
        y1 = jnp.dot(slab1, w1_ref[...], preferred_element_type=jnp.float32)
        y1 = y1 + b1_ref[...]                                        # f32 bias
        h1 = y1[:, :c_out] * jax.nn.sigmoid(y1[:, c_out:c2])         # GLU gate (f32)
        h1 = h1.astype(x_ref.dtype)                                  # bf16 MXU for layer 2

        # ----- layer 2: h1 never leaves the chip (registers + pad-row halo scratch) ----
        slabs2 = []
        for b in range(Bt):
            h1_b = h1[b * TT:(b + 1) * TT, :]
            slabs2.append(taps(hh_ref[b], h1_b))
            hh_ref[b] = h1_b[TT - pa:, :]
        slab2 = jnp.concatenate(slabs2, axis=0)                      # (Bt*TT, K*c_out)
        y2 = jnp.dot(slab2, w2_ref[...], preferred_element_type=jnp.float32)
        y2 = y2 + b2_ref[...]
        h2 = y2[:, :c_out] * jax.nn.sigmoid(y2[:, c_out:])

        # ----- residual (folded downsample columns or identity) + store ---------------
        for b in range(Bt):
            rows = slice(b * TT, (b + 1) * TT)
            if has_down:
                res = y1[rows, c2:]                                  # bias already in b1
            else:
                res = xs[b].astype(jnp.float32)
            o_ref[b] = (h2[rows, :] + res).astype(o_ref.dtype)

    return kernel


# ------------------------------ wrapper / tiling ---------------------------------


@functools.lru_cache(maxsize=1)
def _vmem_limit_bytes():
    phys = 64 * 1024 * 1024                 # conservative default (v7x per-core VMEM)
    try:
        phys = int(pltpu.get_tpu_info().vmem_capacity_bytes)
    except Exception:
        pass
    # Leave ~25% headroom for the compiler; cap so v5e/v6e (128 MiB) stay reasonable.
    return int(min(phys * 3 // 4, 100 * 1024 * 1024))


def _pick_time_tile(T, Bt, cin, c_out, K, has_down, itemsize, q, pa, vmem_limit):
    """Largest time tile whose per-step footprint fits the VMEM budget."""
    c2 = 2 * c_out
    extra = c_out if has_down else 0
    # Rough per-(batch-row x time-row) bytes for one grid step: double-buffered x/out
    # blocks, the lane-concatenated slabs (activation dtype) and f32 pre-activations.
    per_row = ((2 * cin + 2 * c_out) * itemsize
               + (K * cin + K * c_out + c_out) * itemsize
               + 4 * (2 * c2 + extra + 2 * c_out))
    weight_bytes = 2 * itemsize * (K * cin * (c2 + extra) + K * c_out * c2)
    budget = max(vmem_limit // 2 - weight_bytes, q * per_row * Bt)
    cap = int(budget // (per_row * Bt))
    cap = max(q, min(cap, 4096))
    cap -= cap % q
    if T <= cap:
        return T
    tt = cap
    while tt >= q:
        if T % tt == 0 and tt >= pa:
            return tt
        tt -= q
    return T                                  # fallback: one full-length tile


@functools.partial(jax.jit, static_argnames=("kernel_size", "stride", "dilation",
                                             "padding", "time_tile", "batch_tile"))
def gated_temporal_block_forward(x, params, *, kernel_size, stride, dilation,
                                 padding, time_tile=None, batch_tile=None):
    """x: (N, T, n_inputs) in NTC. Returns (N, T, n_outputs)."""
    assert stride == 1, "TCN blocks use stride=1"
    N, T, cin = x.shape
    c2 = params["w2"].shape[-1]
    c_out = c2 // 2
    w1_cols = params["w1"].shape[-1]
    has_down = w1_cols == c2 + c_out
    K, d, pad = kernel_size, dilation, padding
    assert pad == d * (K - 1) and pad >= 1, \
        "residual add / downsample fold require padding == (kernel_size-1)*dilation >= 1"
    assert params["w1"].shape[0] == K * cin and params["w2"].shape[0] == K * c_out
    if not has_down:
        assert cin == c_out, "identity residual requires n_inputs == n_outputs"

    itemsize = jnp.dtype(x.dtype).itemsize
    q = {4: 8, 2: 16, 1: 32}.get(itemsize, 8)      # sublane quantum for this dtype
    pa = ((pad + q - 1) // q) * q                   # halo rows, rounded up for alignment
    vmem_limit = _vmem_limit_bytes()

    # Batch packing: taller MXU M dim / fewer grid steps for small channel counts.
    # TODO(synk): on v7x with N==1 the two TensorCores could instead split the time axis.
    if batch_tile is None:
        Bt = 1
        if c_out < 128 and T % q == 0:
            for cand in (8, 4, 2):
                if N % cand == 0:
                    Bt = cand
                    break
    else:
        Bt = batch_tile
    assert N % Bt == 0, "batch_tile must divide the batch size"

    TT = time_tile if time_tile is not None else _pick_time_tile(
        T, Bt, cin, c_out, K, has_down, itemsize, q, pa, vmem_limit)
    assert T % TT == 0, "time tile must divide T"
    assert TT >= pa, f"time tile ({TT}) must cover the aligned causal halo ({pa})"
    assert TT % q == 0 or (TT == T and Bt == 1), \
        f"time tile must be a multiple of {q} (sublane quantum) unless it spans all of T"

    # Cast weights to the activation dtype so bf16 inputs get true bf16 MXU matmuls
    # (no-op for f32 inputs); biases stay f32 and are added to the f32 accumulator.
    wdt = x.dtype
    args = [x,
            params["w1"].astype(wdt), params["b1"].astype(jnp.float32),
            params["w2"].astype(wdt), params["b2"].astype(jnp.float32)]

    # Grid: batch blocks outer ("parallel"), time inner ("arbitrary", sequential) —
    # the causal halo scratch is carried across time tiles, so time MUST stay innermost.
    grid = (N // Bt, T // TT)
    in_specs = [
        pl.BlockSpec((Bt, TT, cin), lambda n, t: (n, t, 0)),
        # TODO(synk): mark the constant weight blocks pipeline_mode=pl.Buffered(1) on
        # v7x for very large channel counts (they never change across grid steps).
        pl.BlockSpec((K * cin, w1_cols), lambda n, t: (0, 0)),
        pl.BlockSpec((1, w1_cols), lambda n, t: (0, 0)),
        pl.BlockSpec((K * c_out, c2), lambda n, t: (0, 0)),
        pl.BlockSpec((1, c2), lambda n, t: (0, 0)),
    ]

    return pl.pallas_call(
        make_fused_kernel(K, d, pad, pa, c_out, has_down),
        out_shape=jax.ShapeDtypeStruct((N, T, c_out), x.dtype),
        grid=grid,
        in_specs=in_specs,
        out_specs=pl.BlockSpec((Bt, TT, c_out), lambda n, t: (n, t, 0)),
        scratch_shapes=[
            pltpu.VMEM((Bt, pa, cin), x.dtype),     # causal halo of x (pa rows only)
            pltpu.VMEM((Bt, pa, c_out), x.dtype),   # causal halo of h1 (pa rows only)
        ],
        compiler_params=pltpu.CompilerParams(
            dimension_semantics=("parallel", "arbitrary"),
            vmem_limit_bytes=vmem_limit),
    )(*args)


# ------------------------- parameters & pure-JAX reference -------------------------


def _weight_norm_weight(v):
    # PyTorch weight_norm (dim=0): weight[o] = g[o] * v[o] / ||v[o]||; at init g = ||v||.
    norm = jnp.sqrt(jnp.sum(v * v, axis=(1, 2), keepdims=True))
    g = norm
    return g * v / norm


def _to_kernel_layout(w_torch):
    # (Cout2, Cin, K) -> (K*Cin, Cout2); row index = j*Cin + cin matches the in-kernel
    # lane-axis concat of the K dilated taps.
    K = w_torch.shape[-1]
    cin = w_torch.shape[1]
    return jnp.transpose(w_torch, (2, 1, 0)).reshape(K * cin, -1)


def prepare_kernel_params(raw, kernel_size):
    K = kernel_size
    c2, cin, _ = raw["w1"].shape
    c_out = c2 // 2
    w1 = _to_kernel_layout(raw["w1"])                # (K*cin, 2*c_out)
    w2 = _to_kernel_layout(raw["w2"])                # (K*c_out, 2*c_out)
    b1, b2 = raw["b1"], raw["b2"]
    if "w_down" in raw:
        # Fold the 1x1 downsample into the layer-1 matmul: the last tap's slab slice is
        # exactly x[t], so place w_down in those rows of c_out extra output columns.
        wd = jnp.transpose(raw["w_down"][:, :, 0])                   # (cin, c_out)
        down_cols = jnp.zeros((K * cin, c_out), w1.dtype).at[(K - 1) * cin:, :].set(wd)
        w1 = jnp.concatenate([w1, down_cols], axis=1)                # (K*cin, 3*c_out)
        b1 = jnp.concatenate([b1, raw["b_down"]])
    return {"w1": w1, "b1": b1.reshape(1, -1),
            "w2": w2, "b2": b2.reshape(1, -1)}


def init_params(key, n_inputs, n_outputs, kernel_size):
    keys = jax.random.split(key, 6)
    c2 = 2 * n_outputs
    v1 = 0.01 * jax.random.normal(keys[0], (c2, n_inputs, kernel_size), jnp.float32)
    b1 = 0.01 * jax.random.normal(keys[1], (c2,), jnp.float32)
    v2 = 0.01 * jax.random.normal(keys[2], (c2, n_outputs, kernel_size), jnp.float32)
    b2 = 0.01 * jax.random.normal(keys[3], (c2,), jnp.float32)
    raw = {"w1": _weight_norm_weight(v1), "b1": b1,
           "w2": _weight_norm_weight(v2), "b2": b2}            # PyTorch layout
    if n_inputs != n_outputs:                                   # downsample = 1x1 conv
        raw["w_down"] = 0.1 * jax.random.normal(
            keys[4], (n_outputs, n_inputs, 1), jnp.float32)
        raw["b_down"] = 0.01 * jax.random.normal(keys[5], (n_outputs,), jnp.float32)
    return raw, prepare_kernel_params(raw, kernel_size)


def reference_forward(x, raw, *, kernel_size, dilation, padding):
    """Pure-JAX reference (lax conv), mirrors the PyTorch forward at eval."""
    def gated(x_in, w_torch, b):
        w_wio = jnp.transpose(w_torch, (2, 1, 0))                # (K, Cin, Cout2)
        y = lax.conv_general_dilated(
            x_in, w_wio, window_strides=(1,), padding=[(padding, padding)],
            rhs_dilation=(dilation,), dimension_numbers=("NWC", "WIO", "NWC"),
            precision=lax.Precision.HIGHEST)
        y = y + b[None, None, :]
        c = y.shape[-1] // 2
        h = y[..., :c] * jax.nn.sigmoid(y[..., c:])
        return h[:, : h.shape[1] - padding, :]                   # chomp

    h1 = gated(x, raw["w1"], raw["b1"])
    h2 = gated(h1, raw["w2"], raw["b2"])
    if "w_down" in raw:
        res = jnp.einsum("ntc,oc->nto", x, raw["w_down"][:, :, 0],
                         precision=lax.Precision.HIGHEST) + raw["b_down"][None, None, :]
    else:
        res = x
    return h2 + res


if __name__ == "__main__":
    key = jax.random.PRNGKey(0)

    def run_case(n_inputs, n_outputs, batch, T, kernel_size, dilation,
                 time_tile, batch_tile, case_key):
        padding = (kernel_size - 1) * dilation                   # causal TCN padding
        kx, kp = jax.random.split(case_key)
        x = jax.random.normal(kx, (batch, T, n_inputs), jnp.float32)   # NTC
        raw, params = init_params(kp, n_inputs, n_outputs, kernel_size)
        out = gated_temporal_block_forward(
            x, params, kernel_size=kernel_size, stride=1, dilation=dilation,
            padding=padding, time_tile=time_tile, batch_tile=batch_tile)
        out = jax.block_until_ready(out)
        ref = reference_forward(x, raw, kernel_size=kernel_size,
                                dilation=dilation, padding=padding)
        assert out.shape == (batch, T, n_outputs)
        err = float(jnp.max(jnp.abs(out - ref)))
        assert jnp.allclose(out, ref, atol=2e-5, rtol=2e-5), f"mismatch vs reference: {err}"

    k1, k2, k3 = jax.random.split(key, 3)
    # Identity residual; two time tiles exercise the carried causal halo; default
    # batch_tile packs both batch rows into one tall matmul per layer.
    run_case(16, 16, 2, 16, kernel_size=3, dilation=2, time_tile=8, batch_tile=None,
             case_key=k1)
    # n_in != n_out: the 1x1-conv downsample is folded into the layer-1 matmul.
    run_case(8, 16, 2, 16, kernel_size=3, dilation=1, time_tile=None, batch_tile=None,
             case_key=k2)
    # batch_tile=1 path, kernel_size=2, larger dilation, single time tile.
    run_case(16, 16, 1, 32, kernel_size=2, dilation=4, time_tile=None, batch_tile=1,
             case_key=k3)

    print("KERNEL_OK")
</pallas_src>

<mosaic_0001>
module attributes {stable_mosaic.version = 11 : i64} {
  func.func @kernel(%arg0: i32, %arg1: i32, %arg2: memref<2x8x16xf32, #tpu.memory_space<vmem>>, %arg3: memref<48x32xf32, #tpu.memory_space<vmem>>, %arg4: memref<1x32xf32, #tpu.memory_space<vmem>>, %arg5: memref<48x32xf32, #tpu.memory_space<vmem>>, %arg6: memref<1x32xf32, #tpu.memory_space<vmem>>, %arg7: memref<2x8x16xf32, #tpu.memory_space<vmem>>, %arg8: memref<2x8x16xf32, #tpu.memory_space<vmem>>, %arg9: memref<2x8x16xf32, #tpu.memory_space<vmem>>) attributes {dimension_semantics = [#tpu.dimension_semantics<parallel>, #tpu.dimension_semantics<arbitrary>], iteration_bounds = array<i64: 1, 2>, scalar_prefetch = 0 : i64, scratch_operands = 2 : i64, tpu.core_type = #tpu.core_type<tc>, window_params = [{transform_indices = @transform_0, window_bounds = array<i64: 2, 8, 16>}, {pipeline_mode = #tpu.pipeline_mode<synchronous>, transform_indices = @transform_1, window_bounds = array<i64: 48, 32>}, {pipeline_mode = #tpu.pipeline_mode<synchronous>, transform_indices = @transform_2, window_bounds = array<i64: 1, 32>}, {pipeline_mode = #tpu.pipeline_mode<synchronous>, transform_indices = @transform_3, window_bounds = array<i64: 48, 32>}, {pipeline_mode = #tpu.pipeline_mode<synchronous>, transform_indices = @transform_4, window_bounds = array<i64: 1, 32>}, {transform_indices = @transform_5, window_bounds = array<i64: 2, 8, 16>}]} {
    %c0_i32 = arith.constant 0 : i32
    %0 = arith.cmpi eq, %arg1, %c0_i32 : i32
    %1 = arith.extui %0 : i1 to i32
    %c0_i32_0 = arith.constant 0 : i32
    %2 = arith.cmpi ne, %1, %c0_i32_0 : i32
    scf.if %2 {
      %cst_52 = arith.constant 0.000000e+00 : f32
      %91 = vector.broadcast %cst_52 : f32 to vector<2x8x16xf32>
      %c0_53 = arith.constant 0 : index
      %c0_54 = arith.constant 0 : index
      %c0_55 = arith.constant 0 : index
      %92 = vector.load %arg8[%c0_53, %c0_54, %c0_55] : memref<2x8x16xf32, #tpu.memory_space<vmem>>, vector<2x8x16xf32>
      tpu.vector_store %arg8[%c0_53, %c0_54, %c0_55], %91 {strides = array<i32>} : memref<2x8x16xf32, #tpu.memory_space<vmem>>, vector<2x8x16xf32>,
      %cst_56 = arith.constant 0.000000e+00 : f32
      %93 = vector.broadcast %cst_56 : f32 to vector<2x8x16xf32>
      %c0_57 = arith.constant 0 : index
      %c0_58 = arith.constant 0 : index
      %c0_59 = arith.constant 0 : index
      %94 = vector.load %arg9[%c0_57, %c0_58, %c0_59] : memref<2x8x16xf32, #tpu.memory_space<vmem>>, vector<2x8x16xf32>
      tpu.vector_store %arg9[%c0_57, %c0_58, %c0_59], %93 {strides = array<i32>} : memref<2x8x16xf32, #tpu.memory_space<vmem>>, vector<2x8x16xf32>,
    } else {
    }
    %c0 = arith.constant 0 : index
    %c0_1 = arith.constant 0 : index
    %c0_2 = arith.constant 0 : index
    %3 = vector.load %arg2[%c0, %c0_1, %c0_2] : memref<2x8x16xf32, #tpu.memory_space<vmem>>, vector<1x8x16xf32>
    %4 = vector.shape_cast %3 : vector<1x8x16xf32> to vector<8x16xf32>
    %c1 = arith.constant 1 : index
    %c0_3 = arith.constant 0 : index
    %c0_4 = arith.constant 0 : index
    %5 = vector.load %arg2[%c1, %c0_3, %c0_4] : memref<2x8x16xf32, #tpu.memory_space<vmem>>, vector<1x8x16xf32>
    %6 = vector.shape_cast %5 : vector<1x8x16xf32> to vector<8x16xf32>
    %c0_5 = arith.constant 0 : index
    %c0_6 = arith.constant 0 : index
    %c0_7 = arith.constant 0 : index
    %7 = vector.load %arg8[%c0_5, %c0_6, %c0_7] : memref<2x8x16xf32, #tpu.memory_space<vmem>>, vector<1x8x16xf32>
    %8 = vector.shape_cast %7 : vector<1x8x16xf32> to vector<8x16xf32>
    %9 = tpu.concatenate %8, %4 in 0 : vector<8x16xf32>, vector<8x16xf32> -> vector<16x16xf32>
    %c12_i32 = arith.constant 12 : i32
    %10 = tpu.dynamic_rotate %9 by %c12_i32 dim 0 : vector<16x16xf32>, i32 -> vector<16x16xf32>
    %11 = vector.extract_strided_slice %10 {offsets = [0, 0], sizes = [8, 16], strides = [1, 1]} : vector<16x16xf32> to vector<8x16xf32>
    %c10_i32 = arith.constant 10 : i32
    %12 = tpu.dynamic_rotate %9 by %c10_i32 dim 0 : vector<16x16xf32>, i32 -> vector<16x16xf32>
    %13 = vector.extract_strided_slice %12 {offsets = [0, 0], sizes = [8, 16], strides = [1, 1]} : vector<16x16xf32> to vector<8x16xf32>
    %14 = tpu.concatenate %11, %13, %4 in 1 : vector<8x16xf32>, vector<8x16xf32>, vector<8x16xf32> -> vector<8x48xf32>
    %c0_8 = arith.constant 0 : index
    %c0_9 = arith.constant 0 : index
    %c0_10 = arith.constant 0 : index
    %15 = vector.load %arg8[%c0_8, %c0_9, %c0_10] : memref<2x8x16xf32, #tpu.memory_space<vmem>>, vector<1x8x16xf32>
    %16 = vector.shape_cast %15 : vector<1x8x16xf32> to vector<8x16xf32>
    %17 = vector.shape_cast %4 : vector<8x16xf32> to vector<1x8x16xf32>
    tpu.vector_store %arg8[%c0_8, %c0_9, %c0_10], %17 {strides = array<i32>} : memref<2x8x16xf32, #tpu.memory_space<vmem>>, vector<1x8x16xf32>,
    %c1_11 = arith.constant 1 : index
    %c0_12 = arith.constant 0 : index
    %c0_13 = arith.constant 0 : index
    %18 = vector.load %arg8[%c1_11, %c0_12, %c0_13] : memref<2x8x16xf32, #tpu.memory_space<vmem>>, vector<1x8x16xf32>
    %19 = vector.shape_cast %18 : vector<1x8x16xf32> to vector<8x16xf32>
    %20 = tpu.concatenate %19, %6 in 0 : vector<8x16xf32>, vector<8x16xf32> -> vector<16x16xf32>
    %c12_i32_14 = arith.constant 12 : i32
    %21 = tpu.dynamic_rotate %20 by %c12_i32_14 dim 0 : vector<16x16xf32>, i32 -> vector<16x16xf32>
    %22 = vector.extract_strided_slice %21 {offsets = [0, 0], sizes = [8, 16], strides = [1, 1]} : vector<16x16xf32> to vector<8x16xf32>
    %c10_i32_15 = arith.constant 10 : i32
    %23 = tpu.dynamic_rotate %20 by %c10_i32_15 dim 0 : vector<16x16xf32>, i32 -> vector<16x16xf32>
    %24 = vector.extract_strided_slice %23 {offsets = [0, 0], sizes = [8, 16], strides = [1, 1]} : vector<16x16xf32> to vector<8x16xf32>
    %25 = tpu.concatenate %22, %24, %6 in 1 : vector<8x16xf32>, vector<8x16xf32>, vector<8x16xf32> -> vector<8x48xf32>
    %c1_16 = arith.constant 1 : index
    %c0_17 = arith.constant 0 : index
    %c0_18 = arith.constant 0 : index
    %26 = vector.load %arg8[%c1_16, %c0_17, %c0_18] : memref<2x8x16xf32, #tpu.memory_space<vmem>>, vector<1x8x16xf32>
    %27 = vector.shape_cast %26 : vector<1x8x16xf32> to vector<8x16xf32>
    %28 = vector.shape_cast %6 : vector<8x16xf32> to vector<1x8x16xf32>
    tpu.vector_store %arg8[%c1_16, %c0_17, %c0_18], %28 {strides = array<i32>} : memref<2x8x16xf32, #tpu.memory_space<vmem>>, vector<1x8x16xf32>,
    %29 = tpu.concatenate %14, %25 in 0 : vector<8x48xf32>, vector<8x48xf32> -> vector<16x48xf32>
    %c0_19 = arith.constant 0 : index
    %c0_20 = arith.constant 0 : index
    %30 = vector.load %arg3[%c0_19, %c0_20] : memref<48x32xf32, #tpu.memory_space<vmem>>, vector<48x32xf32>
    %cst = arith.constant dense<0.000000e+00> : vector<16x32xf32>
    %31 = tpu.matmul %29, %30, %cst {dimension_numbers = #tpu.dot_dimension_numbers<[1], [0], [0], [1], [0, 0, 1, 1], [], []>} : vector<16x48xf32>, vector<48x32xf32>, vector<16x32xf32> -> vector<16x32xf32>
    %c0_21 = arith.constant 0 : index
    %c0_22 = arith.constant 0 : index
    %32 = vector.load %arg4[%c0_21, %c0_22] : memref<1x32xf32, #tpu.memory_space<vmem>>, vector<1x32xf32>
    %33 = vector.broadcast %32 : vector<1x32xf32> to vector<16x32xf32>
    %34 = arith.addf %31, %33 : vector<16x32xf32>
    %35 = vector.extract_strided_slice %34 {offsets = [0, 0], sizes = [16, 16], strides = [1, 1]} : vector<16x32xf32> to vector<16x16xf32>
    %36 = vector.extract_strided_slice %34 {offsets = [0, 16], sizes = [16, 16], strides = [1, 1]} : vector<16x32xf32> to vector<16x16xf32>
    %37 = arith.negf %36 : vector<16x16xf32>
    %38 = math.exp %37 : vector<16x16xf32>
    %cst_23 = arith.constant 1.000000e+00 : f32
    %39 = vector.broadcast %cst_23 : f32 to vector<16x16xf32>
    %40 = arith.addf %39, %38 : vector<16x16xf32>
    %41 = arith.divf %39, %40 : vector<16x16xf32>
    %42 = arith.mulf %35, %41 : vector<16x16xf32>
    %43 = vector.extract_strided_slice %42 {offsets = [0, 0], sizes = [8, 16], strides = [1, 1]} : vector<16x16xf32> to vector<8x16xf32>
    %c0_24 = arith.constant 0 : index
    %c0_25 = arith.constant 0 : index
    %c0_26 = arith.constant 0 : index
    %44 = vector.load %arg9[%c0_24, %c0_25, %c0_26] : memref<2x8x16xf32, #tpu.memory_space<vmem>>, vector<1x8x16xf32>
    %45 = vector.shape_cast %44 : vector<1x8x16xf32> to vector<8x16xf32>
    %46 = tpu.concatenate %45, %43 in 0 : vector<8x16xf32>, vector<8x16xf32> -> vector<16x16xf32>
    %c12_i32_27 = arith.constant 12 : i32
    %47 = tpu.dynamic_rotate %46 by %c12_i32_27 dim 0 : vector<16x16xf32>, i32 -> vector<16x16xf32>
    %48 = vector.extract_strided_slice %47 {offsets = [0, 0], sizes = [8, 16], strides = [1, 1]} : vector<16x16xf32> to vector<8x16xf32>
    %c10_i32_28 = arith.constant 10 : i32
    %49 = tpu.dynamic_rotate %46 by %c10_i32_28 dim 0 : vector<16x16xf32>, i32 -> vector<16x16xf32>
    %50 = vector.extract_strided_slice %49 {offsets = [0, 0], sizes = [8, 16], strides = [1, 1]} : vector<16x16xf32> to vector<8x16xf32>
    %51 = tpu.concatenate %48, %50, %43 in 1 : vector<8x16xf32>, vector<8x16xf32>, vector<8x16xf32> -> vector<8x48xf32>
    %c0_29 = arith.constant 0 : index
    %c0_30 = arith.constant 0 : index
    %c0_31 = arith.constant 0 : index
    %52 = vector.load %arg9[%c0_29, %c0_30, %c0_31] : memref<2x8x16xf32, #tpu.memory_space<vmem>>, vector<1x8x16xf32>
    %53 = vector.shape_cast %52 : vector<1x8x16xf32> to vector<8x16xf32>
    %54 = vector.shape_cast %43 : vector<8x16xf32> to vector<1x8x16xf32>
    tpu.vector_store %arg9[%c0_29, %c0_30, %c0_31], %54 {strides = array<i32>} : memref<2x8x16xf32, #tpu.memory_space<vmem>>, vector<1x8x16xf32>,
    %55 = vector.extract_strided_slice %42 {offsets = [8, 0], sizes = [8, 16], strides = [1, 1]} : vector<16x16xf32> to vector<8x16xf32>
    %c1_32 = arith.constant 1 : index
    %c0_33 = arith.constant 0 : index
    %c0_34 = arith.constant 0 : index
    %56 = vector.load %arg9[%c1_32, %c0_33, %c0_34] : memref<2x8x16xf32, #tpu.memory_space<vmem>>, vector<1x8x16xf32>
    %57 = vector.shape_cast %56 : vector<1x8x16xf32> to vector<8x16xf32>
    %58 = tpu.concatenate %57, %55 in 0 : vector<8x16xf32>, vector<8x16xf32> -> vector<16x16xf32>
    %c12_i32_35 = arith.constant 12 : i32
    %59 = tpu.dynamic_rotate %58 by %c12_i32_35 dim 0 : vector<16x16xf32>, i32 -> vector<16x16xf32>
    %60 = vector.extract_strided_slice %59 {offsets = [0, 0], sizes = [8, 16], strides = [1, 1]} : vector<16x16xf32> to vector<8x16xf32>
    %c10_i32_36 = arith.constant 10 : i32
    %61 = tpu.dynamic_rotate %58 by %c10_i32_36 dim 0 : vector<16x16xf32>, i32 -> vector<16x16xf32>
    %62 = vector.extract_strided_slice %61 {offsets = [0, 0], sizes = [8, 16], strides = [1, 1]} : vector<16x16xf32> to vector<8x16xf32>
    %63 = tpu.concatenate %60, %62, %55 in 1 : vector<8x16xf32>, vector<8x16xf32>, vector<8x16xf32> -> vector<8x48xf32>
    %c1_37 = arith.constant 1 : index
    %c0_38 = arith.constant 0 : index
    %c0_39 = arith.constant 0 : index
    %64 = vector.load %arg9[%c1_37, %c0_38, %c0_39] : memref<2x8x16xf32, #tpu.memory_space<vmem>>, vector<1x8x16xf32>
    %65 = vector.shape_cast %64 : vector<1x8x16xf32> to vector<8x16xf32>
    %66 = vector.shape_cast %55 : vector<8x16xf32> to vector<1x8x16xf32>
    tpu.vector_store %arg9[%c1_37, %c0_38, %c0_39], %66 {strides = array<i32>} : memref<2x8x16xf32, #tpu.memory_space<vmem>>, vector<1x8x16xf32>,
    %67 = tpu.concatenate %51, %63 in 0 : vector<8x48xf32>, vector<8x48xf32> -> vector<16x48xf32>
    %c0_40 = arith.constant 0 : index
    %c0_41 = arith.constant 0 : index
    %68 = vector.load %arg5[%c0_40, %c0_41] : memref<48x32xf32, #tpu.memory_space<vmem>>, vector<48x32xf32>
    %cst_42 = arith.constant dense<0.000000e+00> : vector<16x32xf32>
    %69 = tpu.matmul %67, %68, %cst_42 {dimension_numbers = #tpu.dot_dimension_numbers<[1], [0], [0], [1], [0, 0, 1, 1], [], []>} : vector<16x48xf32>, vector<48x32xf32>, vector<16x32xf32> -> vector<16x32xf32>
    %c0_43 = arith.constant 0 : index
    %c0_44 = arith.constant 0 : index
    %70 = vector.load %arg6[%c0_43, %c0_44] : memref<1x32xf32, #tpu.memory_space<vmem>>, vector<1x32xf32>
    %71 = vector.broadcast %70 : vector<1x32xf32> to vector<16x32xf32>
    %72 = arith.addf %69, %71 : vector<16x32xf32>
    %73 = vector.extract_strided_slice %72 {offsets = [0, 0], sizes = [16, 16], strides = [1, 1]} : vector<16x32xf32> to vector<16x16xf32>
    %74 = vector.extract_strided_slice %72 {offsets = [0, 16], sizes = [16, 16], strides = [1, 1]} : vector<16x32xf32> to vector<16x16xf32>
    %75 = arith.negf %74 : vector<16x16xf32>
    %76 = math.exp %75 : vector<16x16xf32>
    %cst_45 = arith.constant 1.000000e+00 : f32
    %77 = vector.broadcast %cst_45 : f32 to vector<16x16xf32>
    %78 = arith.addf %77, %76 : vector<16x16xf32>
    %79 = arith.divf %77, %78 : vector<16x16xf32>
    %80 = arith.mulf %73, %79 : vector<16x16xf32>
    %81 = vector.extract_strided_slice %80 {offsets = [0, 0], sizes = [8, 16], strides = [1, 1]} : vector<16x16xf32> to vector<8x16xf32>
    %82 = arith.addf %81, %4 : vector<8x16xf32>
    %c0_46 = arith.constant 0 : index
    %c0_47 = arith.constant 0 : index
    %c0_48 = arith.constant 0 : index
    %83 = vector.load %arg7[%c0_46, %c0_47, %c0_48] : memref<2x8x16xf32, #tpu.memory_space<vmem>>, vector<1x8x16xf32>
    %84 = vector.shape_cast %83 : vector<1x8x16xf32> to vector<8x16xf32>
    %85 = vector.shape_cast %82 : vector<8x16xf32> to vector<1x8x16xf32>
    tpu.vector_store %arg7[%c0_46, %c0_47, %c0_48], %85 {strides = array<i32>} : memref<2x8x16xf32, #tpu.memory_space<vmem>>, vector<1x8x16xf32>,
    %86 = vector.extract_strided_slice %80 {offsets = [8, 0], sizes = [8, 16], strides = [1, 1]} : vector<16x16xf32> to vector<8x16xf32>
    %87 = arith.addf %86, %6 : vector<8x16xf32>
    %c1_49 = arith.constant 1 : index
    %c0_50 = arith.constant 0 : index
    %c0_51 = arith.constant 0 : index
    %88 = vector.load %arg7[%c1_49, %c0_50, %c0_51] : memref<2x8x16xf32, #tpu.memory_space<vmem>>, vector<1x8x16xf32>
    %89 = vector.shape_cast %88 : vector<1x8x16xf32> to vector<8x16xf32>
    %90 = vector.shape_cast %87 : vector<8x16xf32> to vector<1x8x16xf32>
    tpu.vector_store %arg7[%c1_49, %c0_50, %c0_51], %90 {strides = array<i32>} : memref<2x8x16xf32, #tpu.memory_space<vmem>>, vector<1x8x16xf32>,
    return
  }
  func.func @transform_0(%arg0: i32, %arg1: i32) -> (i32, i32, i32) {
    %c0_i32 = arith.constant 0 : i32
    %c0_i32_0 = arith.constant 0 : i32
    return %arg0, %arg1, %c0_i32 : i32, i32, i32
  }
  func.func @transform_1(%arg0: i32, %arg1: i32) -> (i32, i32) {
    %c0_i32 = arith.constant 0 : i32
    %c0_i32_0 = arith.constant 0 : i32
    %c0_i32_1 = arith.constant 0 : i32
    return %c0_i32, %c0_i32_0 : i32, i32
  }
  func.func @transform_2(%arg0: i32, %arg1: i32) -> (i32, i32) {
    %c0_i32 = arith.constant 0 : i32
    %c0_i32_0 = arith.constant 0 : i32
    %c0_i32_1 = arith.constant 0 : i32
    return %c0_i32, %c0_i32_0 : i32, i32
  }
  func.func @transform_3(%arg0: i32, %arg1: i32) -> (i32, i32) {
    %c0_i32 = arith.constant 0 : i32
    %c0_i32_0 = arith.constant 0 : i32
    %c0_i32_1 = arith.constant 0 : i32
    return %c0_i32, %c0_i32_0 : i32, i32
  }
  func.func @transform_4(%arg0: i32, %arg1: i32) -> (i32, i32) {
    %c0_i32 = arith.constant 0 : i32
    %c0_i32_0 = arith.constant 0 : i32
    %c0_i32_1 = arith.constant 0 : i32
    return %c0_i32, %c0_i32_0 : i32, i32
  }
  func.func @transform_5(%arg0: i32, %arg1: i32) -> (i32, i32, i32) {
    %c0_i32 = arith.constant 0 : i32
    %c0_i32_0 = arith.constant 0 : i32
    return %arg0, %arg1, %c0_i32 : i32, i32, i32
  }
}

</mosaic_0001>

<llo_original>
// kernel: gated_temporal_block_forward.1
$region0: #{gated_temporal_block_forward.1}
  #allocation0 [shape = 'u32[]', space=smem, size = 0x4, offset = 0x4, fixed_abs, tag = 'smem constant byte address 0x4 - core index']
  #allocation1 [shape = 'u32[72,128]{1,0:T(1,128)}', space=vmem, size = 0x9000, scoped, tag = 'internal scratch']
  #allocation2 [shape = 'f32[2,8,16]{2,1,0:T(8,128)}', space=vmem, size = 0x2000, scoped, tag = 'scratch operand']
  #allocation3 [shape = 'f32[2,8,16]{2,1,0:T(8,128)}', space=vmem, size = 0x2000, scoped, tag = 'scratch operand']
  %s0 = inlined_call_operand.vmem [shape: f32[2,16,16], index: 0, kind: input, shape index: {}]
  %s1 = inlined_call_operand.vmem [shape: f32[48,32], index: 1, kind: input, shape index: {}]
  %s2 = inlined_call_operand.vmem [shape: f32[1,32], index: 2, kind: input, shape index: {}]
  %s3 = inlined_call_operand.vmem [shape: f32[48,32], index: 3, kind: input, shape index: {}]
  %s4 = inlined_call_operand.vmem [shape: f32[1,32], index: 4, kind: input, shape index: {}]
  %s5 = inlined_call_operand.hbm [shape: f32[2,16,16], index: 5, kind: output, shape index: {}]
  %s6 = sld [smem:[#allocation0]]
  $region95: #{gated_temporal_block_forward.1} parent=0
    _
  %s8 = ssub.s32 1, %s6
  %s9 = scalar_select 0, %s8, %s6
  $region1: #{gated_temporal_block_forward.1} parent=0
    #allocation4 [shape = 'u8[16384]{0}', space=vmem, size = 0x4000, scoped, tag = 'input window, operand 0']
    #allocation5 [shape = 'u8[16384]{0}', space=vmem, size = 0x4000, scoped, tag = 'output window, operand 0']
    #allocation6 [shape = 's32[2]{0}', space=sflag, size = 0x8, scoped, tag = 'scoped memory for gated_temporal_block_forward.1']
    %10 = vsyncpa [#allocation6], 0
    %s11 = scalar_lea.sflag [#allocation6], 1
    %12 = vsyncpa %s11, 0
    loop: start=0, step=1, limit=4
    $region2: #{gated_temporal_block_forward.1} parent=1 // loop_pre_header
      _
    $region3: #{gated_temporal_block_forward.1} parent=1 // loop_header
      %s14 = sphi 0, %s18
      %p15 = scmp.ge.s32.totalorder %s14, 4
      %s21 = sphi 0, %s33
      %s22 = sphi 0, %s29
      %s23 = sphi 0, %s21
      %s24 = sphi 0, %s22
      %s25 = sphi 0, %s23
      %s26 = sphi 0, %s24
      %s38 = sphi 0, %s40
      %s41 = sphi 0, %s38
      %s42 = sphi 0, %s41
      %s58 = sphi 0, %s42
      %s62 = sphi 0, %s62
      %s64 = sphi 0, %s62
      %s65 = sphi 0, %s64
      %s79 = sphi 0, %s65
      %s83 = sphi 0, %s83
      %s85 = sphi 0, %s83
      %s86 = sphi 0, %s85
      %s100 = sphi 0, %s86
      %s104 = sphi 0, %s104
      %s106 = sphi 0, %s104
      %s107 = sphi 0, %s106
      %s121 = sphi 0, %s107
      %s125 = sphi 0, %s125
      %s127 = sphi 0, %s125
      %s128 = sphi 0, %s127
      %s142 = sphi 0, %s128
      %s150 = sphi 0, %s152
      %s153 = sphi 0, %s150
      %s154 = sphi 0, %s153
      %s170 = sphi 0, %s154
    $region4: #{gated_temporal_block_forward.1} parent=1 // loop_header_branch
      %17 = sbr.rel (%p15) target = $region8
    $region5: #{gated_temporal_block_forward.1} parent=1 // loop_body
      %s19 = ssub.s32 %s14, 1
      %s20 = ssub.s32 %s14, 2
      %s27 = sadd.s32 1, %s22
      %p28 = scmp.ge.s32.totalorder %s27, 2
      %s29 = scalar_select %p28, 0, %s27
      %s30 = sadd.s32 1, %s21
      %s31 = scalar_select %p28, %s30, %s21
      %p32 = scmp.ge.s32.totalorder %s31, 1
      %s33 = scalar_select %p32, 0, %s31
      %s34 = ssub.s32 %s21, %s33
      %s35 = ssub.s32 %s22, %s29
      %s36 = sor.u32 %s34, %s35
      %p37 = scmp.eq.s32.totalorder %s36, 0
      %s39 = sadd.s32 %s38, 1
      %s40 = scalar_select %p37, %s38, %s39
      %p43 = pneg %p37
      %p44 = scmp.eq.s32.totalorder %s14, 1
      %p45 = por %p43, %p44
      %p46 = scmp.ne.s32.totalorder %s38, %s41
      %p47 = scmp.eq.s32.totalorder %s14, 0
      %p48 = por %p46, %p47
      %p49 = scmp.ne.s32.totalorder %s38, %s41
      %p50 = scmp.eq.s32.totalorder %s19, 1
      %p51 = por %p49, %p50
      %p52 = scmp.ne.s32.totalorder %s41, %s42
      %p53 = scmp.eq.s32.totalorder %s19, 0
      %p54 = por %p52, %p53
      %p55 = scmp.ne.s32.totalorder %s41, %s42
      %p56 = scmp.eq.s32.totalorder %s20, 1
      %p57 = por %p55, %p56
      %p59 = scmp.ne.s32.totalorder %s42, %s58
      %p60 = scmp.eq.s32.totalorder %s20, 0
      %p61 = por %p59, %p60
      %s63 = sadd.s32 %s62, 1
      %p66 = scmp.eq.s32.totalorder %s14, 1
      %p67 = scmp.ne.s32.totalorder %s62, %s64
      %p68 = scmp.eq.s32.totalorder %s14, 0
      %p69 = por %p67, %p68
      %p70 = scmp.ne.s32.totalorder %s62, %s64
      %p71 = scmp.eq.s32.totalorder %s19, 1
      %p72 = por %p70, %p71
      %p73 = scmp.ne.s32.totalorder %s64, %s65
      %p74 = scmp.eq.s32.totalorder %s19, 0
      %p75 = por %p73, %p74
      %p76 = scmp.ne.s32.totalorder %s64, %s65
      %p77 = scmp.eq.s32.totalorder %s20, 1
      %p78 = por %p76, %p77
      %p80 = scmp.ne.s32.totalorder %s65, %s79
      %p81 = scmp.eq.s32.totalorder %s20, 0
      %p82 = por %p80, %p81
      %s84 = sadd.s32 %s83, 1
      %p87 = scmp.eq.s32.totalorder %s14, 1
      %p88 = scmp.ne.s32.totalorder %s83, %s85
      %p89 = scmp.eq.s32.totalorder %s14, 0
      %p90 = por %p88, %p89
      %p91 = scmp.ne.s32.totalorder %s83, %s85
      %p92 = scmp.eq.s32.totalorder %s19, 1
      %p93 = por %p91, %p92
      %p94 = scmp.ne.s32.totalorder %s85, %s86
      %p95 = scmp.eq.s32.totalorder %s19, 0
      %p96 = por %p94, %p95
      %p97 = scmp.ne.s32.totalorder %s85, %s86
      %p98 = scmp.eq.s32.totalorder %s20, 1
      %p99 = por %p97, %p98
      %p101 = scmp.ne.s32.totalorder %s86, %s100
      %p102 = scmp.eq.s32.totalorder %s20, 0
      %p103 = por %p101, %p102
      %s105 = sadd.s32 %s104, 1
      %p108 = scmp.eq.s32.totalorder %s14, 1
      %p109 = scmp.ne.s32.totalorder %s104, %s106
      %p110 = scmp.eq.s32.totalorder %s14, 0
      %p111 = por %p109, %p110
      %p112 = scmp.ne.s32.totalorder %s104, %s106
      %p113 = scmp.eq.s32.totalorder %s19, 1
      %p114 = por %p112, %p113
      %p115 = scmp.ne.s32.totalorder %s106, %s107
      %p116 = scmp.eq.s32.totalorder %s19, 0
      %p117 = por %p115, %p116
      %p118 = scmp.ne.s32.totalorder %s106, %s107
      %p119 = scmp.eq.s32.totalorder %s20, 1
      %p120 = por %p118, %p119
      %p122 = scmp.ne.s32.totalorder %s107, %s121
      %p123 = scmp.eq.s32.totalorder %s20, 0
      %p124 = por %p122, %p123
      %s126 = sadd.s32 %s125, 1
      %p129 = scmp.eq.s32.totalorder %s14, 1
      %p130 = scmp.ne.s32.totalorder %s125, %s127
      %p131 = scmp.eq.s32.totalorder %s14, 0
      %p132 = por %p130, %p131
      %p133 = scmp.ne.s32.totalorder %s125, %s127
      %p134 = scmp.eq.s32.totalorder %s19, 1
      %p135 = por %p133, %p134
      %p136 = scmp.ne.s32.totalorder %s127, %s128
      %p137 = scmp.eq.s32.totalorder %s19, 0
      %p138 = por %p136, %p137
      %p139 = scmp.ne.s32.totalorder %s127, %s128
      %p140 = scmp.eq.s32.totalorder %s20, 1
      %p141 = por %p139, %p140
      %p143 = scmp.ne.s32.totalorder %s128, %s142
      %p144 = scmp.eq.s32.totalorder %s20, 0
      %p145 = por %p143, %p144
      %s146 = ssub.s32 %s21, %s33
      %s147 = ssub.s32 %s22, %s29
      %s148 = sor.u32 %s146, %s147
      %p149 = scmp.eq.s32.totalorder %s148, 0
      %s151 = sadd.s32 %s150, 1
      %s152 = scalar_select %p149, %s150, %s151
      %p155 = pneg %p149
      %p156 = scmp.eq.s32.totalorder %s14, 1
      %p157 = por %p155, %p156
      %p158 = scmp.ne.s32.totalorder %s150, %s153
      %p159 = scmp.eq.s32.totalorder %s14, 0
      %p160 = por %p158, %p159
      %p161 = scmp.ne.s32.totalorder %s150, %s153
      %p162 = scmp.eq.s32.totalorder %s19, 1
      %p163 = por %p161, %p162
      %p164 = scmp.ne.s32.totalorder %s153, %s154
      %p165 = scmp.eq.s32.totalorder %s19, 0
      %p166 = por %p164, %p165
      %p167 = scmp.ne.s32.totalorder %s153, %s154
      %p168 = scmp.eq.s32.totalorder %s20, 1
      %p169 = por %p167, %p168
      %p171 = scmp.ne.s32.totalorder %s154, %s170
      %p172 = scmp.eq.s32.totalorder %s20, 0
      %p173 = por %p171, %p172
      %p174 = scmp.le.s32.totalorder 1, %s14
      %p175 = scmp.lt.s32.totalorder %s14, 3
      %p176 = pnand %p174, %p175
      %p177 = pneg %p176
      // Predicated region
      $region9: #{gated_temporal_block_forward.1} parent=5 // pred_check
        _
      $region10: #{gated_temporal_block_forward.1} parent=5 // pred_check_branch
        %179 = sbr.rel (%p176) target = $region12
      $region11: #{gated_temporal_block_forward.1} parent=5 // pred_region
        %s180 = ssub.s32 %s14, 1
        // Predicated region
        $region13: #{gated_temporal_block_forward.1} parent=11 // pred_check
          %p181 = pneg %p75
        $region14: #{gated_temporal_block_forward.1} parent=11 // pred_check_branch
          %183 = sbr.rel (%p181) target = $region16
        $region15: #{gated_temporal_block_forward.1} parent=11 // pred_region
          _
        $region16: #{gated_temporal_block_forward.1} parent=11 // pred_fallthru
          _
        // Predicated region
        $region17: #{gated_temporal_block_forward.1} parent=11 // pred_check
          %p184 = pneg %p96
        $region18: #{gated_temporal_block_forward.1} parent=11 // pred_check_branch
          %186 = sbr.rel (%p184) target = $region20
        $region19: #{gated_temporal_block_forward.1} parent=11 // pred_region
          _
        $region20: #{gated_temporal_block_forward.1} parent=11 // pred_fallthru
          _
        // Predicated region
        $region21: #{gated_temporal_block_forward.1} parent=11 // pred_check
          %p187 = pneg %p117
        $region22: #{gated_temporal_block_forward.1} parent=11 // pred_check_branch
          %189 = sbr.rel (%p187) target = $region24
        $region23: #{gated_temporal_block_forward.1} parent=11 // pred_region
          _
        $region24: #{gated_temporal_block_forward.1} parent=11 // pred_fallthru
          _
        // Predicated region
        $region25: #{gated_temporal_block_forward.1} parent=11 // pred_check
          %p190 = pneg %p138
        $region26: #{gated_temporal_block_forward.1} parent=11 // pred_check_branch
          %192 = sbr.rel (%p190) target = $region28
        $region27: #{gated_temporal_block_forward.1} parent=11 // pred_region
          _
        $region28: #{gated_temporal_block_forward.1} parent=11 // pred_fallthru
          _
      $region12: #{gated_temporal_block_forward.1} parent=5 // pred_fallthru
        _
      %p193 = scmp.lt.s32.totalorder %s14, 2
      // Predicated region
      $region29: #{gated_temporal_block_forward.1} parent=5 // pred_check
        %p194 = pneg %p193
      $region30: #{gated_temporal_block_forward.1} parent=5 // pred_check_branch
        %196 = sbr.rel (%p194) target = $region32
      $region31: #{gated_temporal_block_forward.1} parent=5 // pred_region
        // Predicated region
        $region33: #{gated_temporal_block_forward.1} parent=31 // pred_check
          %p197 = pneg %p48
        $region34: #{gated_temporal_block_forward.1} parent=31 // pred_check_branch
          %199 = sbr.rel (%p197) target = $region36
        $region35: #{gated_temporal_block_forward.1} parent=31 // pred_region
          %s200 = sand.u32 %s38, 1
          %s201 = sand.u32 %s38, 1
          %s202 = smul.addr %s201, 16
          %s203 = scalar_lea.vmem [#allocation4], %s202
          %s204 = smul.u32 2, %s21
          %s205 = smul.addr %s204, 2
          %s206 = sadd.s32 %s22, %s205
          %s207 = smul.addr %s206, 8
          %s208 = scalar_lea.vmem %s0, %s207
          // Predicated region
          $region37: #{gated_temporal_block_forward.1} parent=35 // pred_check
            _
          $region38: #{gated_temporal_block_forward.1} parent=35 // pred_check_branch
            %210 = sbr.rel (0) target = $region40
          $region39: #{gated_temporal_block_forward.1} parent=35 // pred_region
            // Predicated region
            $region41: #{gated_temporal_block_forward.1} parent=39 // pred_check
              _
            $region42: #{gated_temporal_block_forward.1} parent=39 // pred_check_branch
              %212 = sbr.rel (0) target = $region44
            $region43: #{gated_temporal_block_forward.1} parent=39 // pred_region
              // Predicated region
              $region56: #{gated_temporal_block_forward.1} parent=43 // pred_check
                _
              $region57: #{gated_temporal_block_forward.1} parent=43 // pred_check_branch
                %230 = sbr.rel (0) target = $region59
              $region58: #{gated_temporal_block_forward.1} parent=43 // pred_region
                loop: start=0, step=1, limit=1
                $region60: #{gated_temporal_block_forward.1} parent=58 // loop_pre_header
                  _
                $region61: #{gated_temporal_block_forward.1} parent=58 // loop_header
                  %s232 = sphi 0, %s236
                  %p233 = scmp.ge.s32.totalorder %s232, 1
                  %s237 = sphi %s208, %s208
                  %s238 = sphi %s203, %s203
                $region62: #{gated_temporal_block_forward.1} parent=58 // loop_header_branch
                  %235 = sbr.rel (%p233) target = $region66
                $region63: #{gated_temporal_block_forward.1} parent=58 // loop_body
                  %v239 = vld [vmem:[%s237] sm:$0xff]
                  %240 = vst [vmem:[%s238] sm:$0xff] %v239
                  %v241 = vld [vmem:[%s237 + $0x10] sm:$0xff]
                  %242 = vst [vmem:[%s238 + $0x8] sm:$0xff] %v241
                $region64: #{gated_temporal_block_forward.1} parent=58 // loop_footer
                  %s236 = sadd.s32 1, %s232
                $region65: #{gated_temporal_block_forward.1} parent=58 // loop_footer_branch
                  %231 = sbr.rel target = $region61
                $region66: #{gated_temporal_block_forward.1} parent=58 // loop_exit
                  _
              $region59: #{gated_temporal_block_forward.1} parent=43 // pred_fallthru
                _
              // Predicated region
              $region67: #{gated_temporal_block_forward.1} parent=43 // pred_check
                _
              $region68: #{gated_temporal_block_forward.1} parent=43 // pred_check_branch
                %244 = sbr.rel target = $region70
              $region69: #{gated_temporal_block_forward.1} parent=43 // pred_region
                _
              $region70: #{gated_temporal_block_forward.1} parent=43 // pred_fallthru
                _
            $region44: #{gated_temporal_block_forward.1} parent=39 // pred_fallthru
              _
            // Predicated region
            $region45: #{gated_temporal_block_forward.1} parent=39 // pred_check
              _
            $region46: #{gated_temporal_block_forward.1} parent=39 // pred_check_branch
              %214 = sbr.rel target = $region48
            $region47: #{gated_temporal_block_forward.1} parent=39 // pred_region
              %s216 = ssub.s32 256, 1
              loop: start=0, step=1, limit=1
              $region49: #{gated_temporal_block_forward.1} parent=47 // loop_pre_header
                _
              $region50: #{gated_temporal_block_forward.1} parent=47 // loop_header
                %s218 = sphi 0, %s222
                %p219 = scmp.ge.s32.totalorder %s218, 1
                %s223 = sphi %s208, %s208
                %s224 = sphi %s203, %s203
              $region51: #{gated_temporal_block_forward.1} parent=47 // loop_header_branch
                %221 = sbr.rel (%p219) target = $region55
              $region52: #{gated_temporal_block_forward.1} parent=47 // loop_body
                %v225 = vld [vmem:[%s223] sm:%s216]
                %226 = vst [vmem:[%s224] sm:%s216] %v225
                %v227 = vld [vmem:[%s223 + $0x10] sm:%s216]
                %228 = vst [vmem:[%s224 + $0x8] sm:%s216] %v227
              $region53: #{gated_temporal_block_forward.1} parent=47 // loop_footer
                %s222 = sadd.s32 1, %s218
              $region54: #{gated_temporal_block_forward.1} parent=47 // loop_footer_branch
                %217 = sbr.rel target = $region50
              $region55: #{gated_temporal_block_forward.1} parent=47 // loop_exit
                _
            $region48: #{gated_temporal_block_forward.1} parent=39 // pred_fallthru
              _
          $region40: #{gated_temporal_block_forward.1} parent=35 // pred_fallthru
            _
          %245 = vnop
        $region36: #{gated_temporal_block_forward.1} parent=31 // pred_fallthru
          _
      $region32: #{gated_temporal_block_forward.1} parent=5 // pred_fallthru
        _
      %p246 = scmp.le.s32.totalorder 1, %s14
      %p247 = scmp.lt.s32.totalorder %s14, 3
      %p248 = pnand %p246, %p247
      %p249 = pneg %p248
      // Predicated region
      $region71: #{gated_temporal_block_forward.1} parent=5 // pred_check
        _
      $region72: #{gated_temporal_block_forward.1} parent=5 // pred_check_branch
        %251 = sbr.rel (%p248) target = $region74
      $region73: #{gated_temporal_block_forward.1} parent=5 // pred_region
        %s252 = ssub.s32 %s14, 1
        %s253 = sand.u32 %s41, 1
        %s254 = sand.u32 %s41, 1
        %s255 = smul.addr %s254, 16
        %s256 = scalar_lea.vmem [#allocation4], %s255
        // Predicated region
        $region75: #{gated_temporal_block_forward.1} parent=73 // pred_check
          %p257 = pneg %p54
        $region76: #{gated_temporal_block_forward.1} parent=73 // pred_check_branch
          %259 = sbr.rel (%p257) target = $region78
        $region77: #{gated_temporal_block_forward.1} parent=73 // pred_region
          _
        $region78: #{gated_temporal_block_forward.1} parent=73 // pred_fallthru
          _
        %s260 = sand.u32 %s41, 1
        %s261 = sand.u32 %s41, 1
        %s262 = smul.addr %s261, 16
        %s263 = scalar_lea.vmem [#allocation4], %s262
        %p264 = pneg %p54
        %p265 = pneg %p51
        %p266 = pneg %p75
        %p267 = pneg %p72
        %p268 = pneg %p96
        %p269 = pneg %p93
        %p270 = pneg %p117
        %p271 = pneg %p114
        %p272 = pneg %p138
        %p273 = pneg %p135
        %p274 = pneg %p166
        %p275 = pneg %p163
        %s276 = sand.u32 %s153, 1
        %s277 = scalar_lea.sflag [#allocation6], %s276
        %s278 = sand.u32 %s153, 1
        %s279 = smul.addr %s278, 16
        %s280 = scalar_lea.vmem [#allocation5], %s279
        %s281 = smul.u32 2, %s23
        %s282 = smul.u32 2, %s23
        %p283 = scmp.eq.s32.totalorder %s24, 0
        // Predicated region
        $region79: #{gated_temporal_block_forward.1} parent=73 // pred_check
          %p284 = pneg %p283
        $region80: #{gated_temporal_block_forward.1} parent=73 // pred_check_branch
          %286 = sbr.rel (%p284) target = $region82
        $region81: #{gated_temporal_block_forward.1} parent=73 // pred_region
          %vm287 = vcmask 130048
          %288 = vst.msk [vmem:[#allocation2] sm:$0xff] %vm287, 0.0
          %289 = vst.msk [vmem:[#allocation2 + $0x8] sm:$0xff] %vm287, 0.0
          %290 = vst.msk [vmem:[#allocation3] sm:$0xff] %vm287, 0.0
          %291 = vst.msk [vmem:[#allocation3 + $0x8] sm:$0xff] %vm287, 0.0
        $region82: #{gated_temporal_block_forward.1} parent=73 // pred_fallthru
          _
        %v292 = vld [vmem:[%s256] sm:$0xff]
        %s293 = scalar_lea.vmem %s256, 8 [#allocation4]
        %v294 = vld [vmem:[%s293] sm:$0xff]
        %v295 = vld [vmem:[#allocation2] sm:$0xff]
        %v296 = vrot.slane %v295, 4
        %v297 = vrot.slane %v292, 4
        %v298 = vlaneseq
        %v299 = vshrl.u32 %v298, 7
        %vm300 = vcmp.lt.s32.totalorder %v299, 4
        %v301 = vsel %vm300, %v296, %v297
        %v302 = vrot.slane %v295, 6
        %v303 = vrot.slane %v292, 6
        %vm304 = vcmp.lt.s32.totalorder %v299, 2
        %v305 = vsel %vm304, %v302, %v303
        %307 = vrot.lane.b32.xlu0 %v305, 16
        %v308 = vpop.permute.xlu0 %307
        %311 = vrot.lane.b32.xlu0 %v292, 32
        %v312 = vpop.permute.xlu0 %311
        %vm314 = vcmask 130048
        %v315 = vsel %vm314, %v301, %v308
        %vm316 = vcmask 261120
        %v317 = vsel %vm316, %v315, %v312
        %318 = vst.msk [vmem:[#allocation2] sm:$0xff] %vm314, %v292
        %s319 = scalar_lea.vmem [#allocation2], 8
        %v320 = vld [vmem:[%s319] sm:$0xff]
        %v321 = vrot.slane %v320, 4
        %v322 = vrot.slane %v294, 4
        %v323 = vsel %vm300, %v321, %v322
        %v324 = vrot.slane %v320, 6
        %v325 = vrot.slane %v294, 6
        %v326 = vsel %vm304, %v324, %v325
        %328 = vrot.lane.b32.xlu0 %v326, 16
        %v329 = vpop.permute.xlu0 %328
        %332 = vrot.lane.b32.xlu0 %v294, 32
        %v333 = vpop.permute.xlu0 %332
        %v335 = vsel %vm314, %v323, %v329
        %v336 = vsel %vm316, %v335, %v333
        %337 = vst.msk [vmem:[%s319] sm:$0xff] %vm314, %v294
        %v338 = vld [vmem:[%s1] sm:$0xff]
        %v339 = vld [vmem:[%s1 + $0x8] sm:$0xff]
        %v340 = vld [vmem:[%s1 + $0x10] sm:$0xff]
        %v341 = vld [vmem:[%s1 + $0x18] sm:$0xff]
        %v342 = vld [vmem:[%s1 + $0x20] sm:$0xff]
        %v343 = vld [vmem:[%s1 + $0x28] sm:$0xff]
        %v344 = vld [vmem:[%s2] sm:$0x1]
        %v346 = vperm.slane %v344, 0
        %vm348 = vcmask 392192
        %v350 = vsel %vm348, %v317, 0
        %v353 = vsel %vm348, %v336, 0
        %355 = vmatpush.msra.mxu0 0.0
        %356 = vmatpush.msra.mxu0 0.0
        %357 = vmatpush.msra.mxu0 0.0
        %358 = vmatpush.msra.mxu0 0.0
        %359 = vmatpush.msra.mxu0 0.0
        %360 = vmatpush.msra.mxu0 0.0
        %361 = vmatpush.msra.mxu0 0.0
        %362 = vmatpush.msra.mxu0 0.0
        %363 = vmatpush.msra.mxu0 0.0
        %364 = vmatpush.msra.mxu0 0.0
        %365 = vmatpush.msra.mxu0 %v343
        %366 = vmatpush.msra.mxu0 %v342
        %367 = vmatpush.msra.mxu0 %v341
        %368 = vmatpush.msra.mxu0 %v340
        %369 = vmatpush.msra.mxu0 %v339
        %370 = vmatpush.msra.mxu0 %v338
        %371 = vmatmul.f32.gmra.mxu0 %v350
        %v372 = vpop.f32.mrf.mxu0
        %v373 = vadd.f32 %v346, %v372
        %374 = vmatmul.f32.gmra.mxu0 %v353
        %v375 = vpop.f32.mrf.mxu0
        %v376 = vadd.f32 %v346, %v375
        %377 = vdwg.mxu0
        %v378 = vxor.u32 %v373, 2147483648
        %v379 = vxor.u32 %v376, 2147483648
        %v380 = vmul.f32 %v378, 1.442695
        %v381 = vpow.pop %v380
        %v382 = vmul.f32 %v379, 1.442695
        %v383 = vpow.pop %v382
        %v384 = vadd.f32 %v381, 1.0
        %v385 = vadd.f32 %v383, 1.0
        %v386 = vrcp.pop %v384
        %v387 = vmul.f32 %v384, %v386
        %v388 = vsub.f32 1.0, %v387
        %v389 = vmul.f32 %v386, %v388
        %v390 = vadd.f32 %v386, %v389
        %vm391 = vweird.f32 %v384
        %vm392 = vweird.f32 %v386
        %vm393 = vmor %vm391, %vm392
        %v394 = vsel %vm393, %v386, %v390
        %v395 = vand.u32 2147483647, %v384
        %vm396 = vcmp.eq.f32.partialorder %v395, 8.507059e+37
        %v397 = vand.u32 %v384, 2147483648
        %v398 = vor.u32 1.1754944e-38, %v397
        %v399 = vsel %vm396, %v398, %v394
        %v400 = vmul.f32 1.0, %v399
        %v401 = vrcp.pop %v385
        %v402 = vmul.f32 %v385, %v401
        %v403 = vsub.f32 1.0, %v402
        %v404 = vmul.f32 %v401, %v403
        %v405 = vadd.f32 %v401, %v404
        %vm406 = vweird.f32 %v385
        %vm407 = vweird.f32 %v401
        %vm408 = vmor %vm406, %vm407
        %v409 = vsel %vm408, %v401, %v405
        %v410 = vand.u32 2147483647, %v385
        %vm411 = vcmp.eq.f32.partialorder %v410, 8.507059e+37
        %v412 = vand.u32 %v385, 2147483648
        %v413 = vor.u32 1.1754944e-38, %v412
        %v414 = vsel %vm411, %v413, %v409
        %v415 = vmul.f32 1.0, %v414
        %418 = vrot.lane.b32.xlu0 %v400, 112
        %v419 = vpop.permute.xlu0 %418
        %420 = vrot.lane.b32.xlu0 %v415, 112
        %v421 = vpop.permute.xlu0 %420
        %v424 = vmul.f32 %v373, %v419
        %v425 = vmul.f32 %v376, %v421
        %v426 = vld [vmem:[#allocation3] sm:$0xff]
        %v427 = vrot.slane %v426, 4
        %v428 = vrot.slane %v424, 4
        %v429 = vsel %vm300, %v427, %v428
        %v430 = vrot.slane %v426, 6
        %v431 = vrot.slane %v424, 6
        %v432 = vsel %vm304, %v430, %v431
        %434 = vrot.lane.b32.xlu0 %v432, 16
        %v435 = vpop.permute.xlu0 %434
        %438 = vrot.lane.b32.xlu0 %v424, 32
        %v439 = vpop.permute.xlu0 %438
        %v441 = vsel %vm314, %v429, %v435
        %v442 = vsel %vm316, %v441, %v439
        %443 = vst.msk [vmem:[#allocation3] sm:$0xff] %vm314, %v424
        %s444 = scalar_lea.vmem [#allocation3], 8
        %v445 = vld [vmem:[%s444] sm:$0xff]
        %v446 = vrot.slane %v445, 4
        %v447 = vrot.slane %v425, 4
        %v448 = vsel %vm300, %v446, %v447
        %v449 = vrot.slane %v445, 6
        %v450 = vrot.slane %v425, 6
        %v451 = vsel %vm304, %v449, %v450
        %453 = vrot.lane.b32.xlu0 %v451, 16
        %v454 = vpop.permute.xlu0 %453
        %457 = vrot.lane.b32.xlu0 %v425, 32
        %v458 = vpop.permute.xlu0 %457
        %v460 = vsel %vm314, %v448, %v454
        %v461 = vsel %vm316, %v460, %v458
        %462 = vst.msk [vmem:[%s444] sm:$0xff] %vm314, %v425
        %v463 = vld [vmem:[%s3] sm:$0xff]
        %v464 = vld [vmem:[%s3 + $0x8] sm:$0xff]
        %v465 = vld [vmem:[%s3 + $0x10] sm:$0xff]
        %v466 = vld [vmem:[%s3 + $0x18] sm:$0xff]
        %v467 = vld [vmem:[%s3 + $0x20] sm:$0xff]
        %v468 = vld [vmem:[%s3 + $0x28] sm:$0xff]
        %v469 = vld [vmem:[%s4] sm:$0x1]
        %v471 = vperm.slane %v469, 0
        %v474 = vsel %vm348, %v442, 0
        %v477 = vsel %vm348, %v461, 0
        %479 = vmatpush.msra.mxu0 0.0
        %480 = vmatpush.msra.mxu0 0.0
        %481 = vmatpush.msra.mxu0 0.0
        %482 = vmatpush.msra.mxu0 0.0
        %483 = vmatpush.msra.mxu0 0.0
        %484 = vmatpush.msra.mxu0 0.0
        %485 = vmatpush.msra.mxu0 0.0
        %486 = vmatpush.msra.mxu0 0.0
        %487 = vmatpush.msra.mxu0 0.0
        %488 = vmatpush.msra.mxu0 0.0
        %489 = vmatpush.msra.mxu0 %v468
        %490 = vmatpush.msra.mxu0 %v467
        %491 = vmatpush.msra.mxu0 %v466
        %492 = vmatpush.msra.mxu0 %v465
        %493 = vmatpush.msra.mxu0 %v464
        %494 = vmatpush.msra.mxu0 %v463
        %495 = vmatmul.f32.gmra.mxu0 %v474
        %v496 = vpop.f32.mrf.mxu0
        %v497 = vadd.f32 %v471, %v496
        %498 = vmatmul.f32.gmra.mxu0 %v477
        %v499 = vpop.f32.mrf.mxu0
        %v500 = vadd.f32 %v471, %v499
        %501 = vdwg.mxu0
        %v502 = vxor.u32 %v497, 2147483648
        %v503 = vxor.u32 %v500, 2147483648
        %v504 = vmul.f32 %v502, 1.442695
        %v505 = vpow.pop %v504
        %v506 = vmul.f32 %v503, 1.442695
        %v507 = vpow.pop %v506
        %v508 = vadd.f32 %v505, 1.0
        %v509 = vadd.f32 %v507, 1.0
        %v510 = vrcp.pop %v508
        %v511 = vmul.f32 %v508, %v510
        %v512 = vsub.f32 1.0, %v511
        %v513 = vmul.f32 %v510, %v512
        %v514 = vadd.f32 %v510, %v513
        %vm515 = vweird.f32 %v508
        %vm516 = vweird.f32 %v510
        %vm517 = vmor %vm515, %vm516
        %v518 = vsel %vm517, %v510, %v514
        %v519 = vand.u32 2147483647, %v508
        %vm520 = vcmp.eq.f32.partialorder %v519, 8.507059e+37
        %v521 = vand.u32 %v508, 2147483648
        %v522 = vor.u32 1.1754944e-38, %v521
        %v523 = vsel %vm520, %v522, %v518
        %v524 = vmul.f32 1.0, %v523
        %v525 = vrcp.pop %v509
        %v526 = vmul.f32 %v509, %v525
        %v527 = vsub.f32 1.0, %v526
        %v528 = vmul.f32 %v525, %v527
        %v529 = vadd.f32 %v525, %v528
        %vm530 = vweird.f32 %v509
        %vm531 = vweird.f32 %v525
        %vm532 = vmor %vm530, %vm531
        %v533 = vsel %vm532, %v525, %v529
        %v534 = vand.u32 2147483647, %v509
        %vm535 = vcmp.eq.f32.partialorder %v534, 8.507059e+37
        %v536 = vand.u32 %v509, 2147483648
        %v537 = vor.u32 1.1754944e-38, %v536
        %v538 = vsel %vm535, %v537, %v533
        %v539 = vmul.f32 1.0, %v538
        %542 = vrot.lane.b32.xlu0 %v524, 112
        %v543 = vpop.permute.xlu0 %542
        %544 = vrot.lane.b32.xlu0 %v539, 112
        %v545 = vpop.permute.xlu0 %544
        %v548 = vmul.f32 %v497, %v543
        %v549 = vmul.f32 %v500, %v545
        %v550 = vadd.f32 %v548, %v292
        %551 = vst.msk [vmem:[%s280] sm:$0xff] %vm314, %v550
        %v552 = vadd.f32 %v549, %v294
        %s553 = scalar_lea.vmem %s280, 8 [#allocation5]
        %554 = vst.msk [vmem:[%s553] sm:$0xff] %vm314, %v552
        %s555 = sand.u32 %s153, 1
        %s556 = scalar_lea.sflag [#allocation6], %s555
        %s557 = sand.u32 %s153, 1
        %s558 = smul.addr %s557, 16
        %s559 = scalar_lea.vmem [#allocation5], %s558
        // Predicated region
        $region83: #{gated_temporal_block_forward.1} parent=73 // pred_check
          %p560 = pneg %p163
        $region84: #{gated_temporal_block_forward.1} parent=73 // pred_check_branch
          %562 = sbr.rel (%p560) target = $region86
        $region85: #{gated_temporal_block_forward.1} parent=73 // pred_region
          %s563 = smul.u32 2, %s23
          %565 = vsyncadd %s556, 0
          %s566 = smul.addr %s563, 2
          %s567 = sadd.s32 %s24, %s566
          %s568 = smul.addr %s567, 8
          %s569 = scalar_lea.hbm %s5, %s568
          %s570 = sshll.u32 %s559, 4
          %s571 = int_to_ptr.vmem [resolvable:$true] %s570
          %s572 = sshll.u32 %s569, 4
          %s573 = int_to_ptr.hbm [resolvable:$true] %s572
          %578 = dma.vmem_to_hbm [thread:$0]  %s571, 256, %s573, %s556, 128, 256, 8
        $region86: #{gated_temporal_block_forward.1} parent=73 // pred_fallthru
          _
      $region74: #{gated_temporal_block_forward.1} parent=5 // pred_fallthru
        _
      %p579 = scmp.le.s32.totalorder 2, %s14
      // Predicated region
      $region87: #{gated_temporal_block_forward.1} parent=5 // pred_check
        %p580 = pneg %p579
      $region88: #{gated_temporal_block_forward.1} parent=5 // pred_check_branch
        %582 = sbr.rel (%p580) target = $region90
      $region89: #{gated_temporal_block_forward.1} parent=5 // pred_region
        %s583 = ssub.s32 %s14, 2
        // Predicated region
        $region91: #{gated_temporal_block_forward.1} parent=89 // pred_check
          %p584 = pneg %p169
        $region92: #{gated_temporal_block_forward.1} parent=89 // pred_check_branch
          %586 = sbr.rel (%p584) target = $region94
        $region93: #{gated_temporal_block_forward.1} parent=89 // pred_region
          %s587 = sand.u32 %s154, 1
          %s588 = scalar_lea.sflag [#allocation6], %s587
          %s589 = sand.u32 %s154, 1
          %s590 = smul.addr %s589, 16
          %s591 = scalar_lea.vmem [#allocation5], %s590
          %593 = dma.done %s588, 256
        $region94: #{gated_temporal_block_forward.1} parent=89 // pred_fallthru
          _
      $region90: #{gated_temporal_block_forward.1} parent=5 // pred_fallthru
        _
    $region6: #{gated_temporal_block_forward.1} parent=1 // loop_footer
      %s18 = sadd.s32 1, %s14
    $region7: #{gated_temporal_block_forward.1} parent=1 // loop_footer_branch
      %13 = sbr.rel target = $region3
    $region8: #{gated_temporal_block_forward.1} parent=1 // loop_exit
      _
    %594 = vsyncpa [#allocation6], 1
    %s595 = scalar_lea.sflag [#allocation6], 1
    %596 = vsyncpa %s595, 1

</llo_original>
